<compile_context>
chip_gen: v7x
topology: tpu7x:2x2x1
jax: 0.10.0
libtpu: 0.0.40
codegen_flags: <defaults>
</compile_context>

<pallas_src>
import functools

import jax
import jax.numpy as jnp
from jax import lax
from jax.experimental import pallas as pl
from jax.experimental.pallas import tpu as pltpu

_LANES = 128
_SUBLANES = 8


def _sublane_pack(itemsize):
    """Sublane granularity of the packed tile: 8 (f32), 16 (bf16), 32 (int8)."""
    return _SUBLANES * max(1, 4 // max(1, int(itemsize)))


def _pick_wide(n_main, itemsize):
    """Largest lane-dense width (multiple of 128) giving a copy-free reshape."""
    sub = _sublane_pack(itemsize)
    for w in (4096, 2048, 1024, 512, 256, 128):
        if n_main % w == 0 and (n_main // w) % sub == 0:
            return w
    for w in (4096, 2048, 1024, 512, 256, 128):
        if n_main % w == 0:
            return w
    return _LANES  # n_main is always a multiple of 128


def _vmem_limit_bytes():
    """Scoped-VMEM budget: ~3/4 of physical capacity, capped at 64 MiB."""
    try:
        cap = pltpu.get_tpu_info().vmem_capacity_bytes
    except Exception:
        cap = 64 * 1024 * 1024
    return int(min(64 * 1024 * 1024, max(32 * 1024 * 1024, (cap * 3) // 4)))


def _pick_tile_rows(rows, wide, itemsize, num_streams, vmem_limit):
    """Tile rows from VMEM budget: tile_bytes ~= 0.75*limit/(2 bufs * streams).

    Prefers a sublane-aligned divisor of `rows` near the target so the grid is
    ragged-free.  Returns (tile_rows, ragged).
    """
    sub = _sublane_pack(itemsize)
    row_bytes = wide * itemsize
    target_bytes = (3 * vmem_limit // 4) // (2 * num_streams)
    cap = max(sub, (target_bytes // row_bytes) // sub * sub)
    if rows <= cap:
        return rows, False
    c = cap
    while c >= sub:
        if rows % c == 0:
            if c >= max(sub, cap // 2):
                return c, False  # ragged-free and still near the target size
            break
        c -= sub
    return cap, (rows % cap) != 0


def _is_multi_tc():
    """True on chips with >1 TensorCore per chip (v7x) where a 'parallel'
    grid axis can be sharded across cores."""
    try:
        kind = jax.devices()[0].device_kind.lower()
    except Exception:
        return False
    return "v7" in kind


def _tile_sq_sum(x, rows, tile_rows, ragged):
    """f32 sum of squares of this tile; only the last tile pays for the mask."""
    xf = x.astype(jnp.float32)
    sq = xf * xf
    if not ragged:
        return jnp.sum(sq)

    def _masked():
        r0 = pl.program_id(0) * tile_rows
        rid = r0 + lax.broadcasted_iota(jnp.int32, sq.shape, 0)
        return jnp.sum(jnp.where(rid < rows, sq, jnp.float32(0.0)))

    def _plain():
        return jnp.sum(sq)

    return lax.cond(pl.program_id(0) == pl.num_programs(0) - 1, _masked, _plain)


def _value_kernel(alpha_ref, x_ref, val_ref, *, rows, tile_rows, ragged,
                  accumulate):
    s = _tile_sq_sum(x_ref[...], rows, tile_rows, ragged)
    v = 0.5 * alpha_ref[0, 0] * s
    if accumulate:
        @pl.when(pl.program_id(0) == 0)
        def _():
            val_ref[...] = jnp.zeros_like(val_ref)
        val_ref[...] += v
    else:
        val_ref[...] = jnp.full(val_ref.shape, v, dtype=val_ref.dtype)


def _value_grad_kernel(alpha_ref, x_ref, val_ref, grad_ref, *, rows, tile_rows,
                       ragged, accumulate):
    x = x_ref[...]
    alpha = alpha_ref[0, 0]
    s = _tile_sq_sum(x, rows, tile_rows, ragged)
    v = 0.5 * alpha * s
    if accumulate:
        @pl.when(pl.program_id(0) == 0)
        def _():
            val_ref[...] = jnp.zeros_like(val_ref)
        val_ref[...] += v
    else:
        val_ref[...] = jnp.full(val_ref.shape, v, dtype=val_ref.dtype)
    # Gradient stays in the input dtype (no f32 upcast on the store path).
    grad_ref[...] = (x * alpha.astype(x.dtype)).astype(grad_ref.dtype)


class Regularizer:
    """Pallas-backed Tikhonov regularizer: 0.5 * alpha * ||x||^2."""

    def __init__(self, alpha=1.0):
        self.alpha = float(alpha)

    def __call__(self, fctn=None, x=None, y=None, s=None,
                 do_gradient=False, do_Hessian=False):
        alpha = self.alpha
        orig_shape = x.shape
        orig_dtype = x.dtype
        n = int(x.size)
        itemsize = jnp.dtype(orig_dtype).itemsize
        x_flat = x.reshape(-1)

        # alpha == 1 (constructor default): grad === x -> never write a grad
        # HBM stream, just alias the input as the gradient.
        grad_is_x = do_gradient and (alpha == 1.0)
        need_grad_kernel = do_gradient and not grad_is_x

        # Lane-dense prefix for the kernel + tiny (<128 elem) jnp tail; no
        # wrapper-side zero-pad / un-pad copies of the full array.
        n_main = (n // _LANES) * _LANES
        x_main = x_flat if n_main == n else x_flat[:n_main]
        tail = None if n_main == n else x_flat[n_main:]

        value = jnp.zeros((), jnp.float32)
        grad_main = None

        if n_main > 0:
            wide = _pick_wide(n_main, itemsize)
            rows = n_main // wide
            x2d = x_main.reshape(rows, wide)   # copy-free on the common path

            vmem_limit = _vmem_limit_bytes()
            num_streams = 2 if need_grad_kernel else 1
            tile_rows, ragged = _pick_tile_rows(rows, wide, itemsize,
                                                num_streams, vmem_limit)
            num_tiles = pl.cdiv(rows, tile_rows)

            # v7x (2 TCs): per-tile partials + "parallel" axis.  v5e/v6e
            # (1 TC): resident accumulator + "arbitrary" axis (no partials
            # stream, no extra jnp.sum launch).
            multi_tc = _is_multi_tc() and num_tiles > 1
            if multi_tc:
                val_spec = pl.BlockSpec((1, 1), lambda i: (i, 0))
                val_shape = jax.ShapeDtypeStruct((num_tiles, 1), jnp.float32)
                semantics = ("parallel",)
            else:
                val_spec = pl.BlockSpec((1, 1), lambda i: (0, 0))
                val_shape = jax.ShapeDtypeStruct((1, 1), jnp.float32)
                semantics = ("arbitrary",)

            alpha_arr = jnp.full((1, 1), alpha, dtype=jnp.float32)
            alpha_spec = pl.BlockSpec(memory_space=pltpu.MemorySpace.SMEM)
            x_spec = pl.BlockSpec((tile_rows, wide), lambda i: (i, 0))

            data_bytes = n_main * itemsize * (2 if need_grad_kernel else 1)
            cost = pl.CostEstimate(
                flops=int(3 * n_main),
                transcendentals=0,
                bytes_accessed=int(data_bytes + 4 * num_tiles + 8),
            )
            cparams = pltpu.CompilerParams(
                dimension_semantics=semantics,
                vmem_limit_bytes=vmem_limit,
            )

            if need_grad_kernel:
                kernel = functools.partial(
                    _value_grad_kernel, rows=rows, tile_rows=tile_rows,
                    ragged=ragged, accumulate=not multi_tc)
                parts, grad2d = pl.pallas_call(
                    kernel,
                    grid=(num_tiles,),
                    in_specs=[alpha_spec, x_spec],
                    out_specs=(val_spec,
                               pl.BlockSpec((tile_rows, wide),
                                            lambda i: (i, 0))),
                    out_shape=(val_shape,
                               jax.ShapeDtypeStruct((rows, wide), orig_dtype)),
                    compiler_params=cparams,
                    cost_estimate=cost,
                )(alpha_arr, x2d)
                grad_main = grad2d.reshape(-1)
            else:
                kernel = functools.partial(
                    _value_kernel, rows=rows, tile_rows=tile_rows,
                    ragged=ragged, accumulate=not multi_tc)
                parts = pl.pallas_call(
                    kernel,
                    grid=(num_tiles,),
                    in_specs=[alpha_spec, x_spec],
                    out_specs=val_spec,
                    out_shape=val_shape,
                    compiler_params=cparams,
                    cost_estimate=cost,
                )(alpha_arr, x2d)

            value = jnp.sum(parts) if multi_tc else parts[0, 0]

        if tail is not None:
            tail_f = tail.astype(jnp.float32)
            value = value + 0.5 * alpha * jnp.sum(tail_f * tail_f)

        grad = None
        if do_gradient:
            if grad_is_x:
                grad = x
            else:
                pieces = []
                if grad_main is not None:
                    pieces.append(grad_main)
                if tail is not None:
                    pieces.append(
                        (alpha * tail.astype(jnp.float32)).astype(orig_dtype))
                grad_flat = (pieces[0] if len(pieces) == 1
                             else jnp.concatenate(pieces))
                grad = grad_flat.reshape(orig_shape)

        hess = None
        if do_Hessian:
            # TODO(synk): Hessian of 0.5*alpha*||x||^2 is alpha * I; returned
            # as scalar metadata rather than a materialized matrix/operator.
            hess = self.alpha
        return value, grad, hess


if __name__ == "__main__":
    key = jax.random.PRNGKey(0)
    x = jax.random.normal(key, (2, 4, 16, 16), dtype=jnp.float32)

    reg1 = Regularizer(alpha=1.0)
    v1, g1, h1 = reg1(x=x, do_gradient=True, do_Hessian=True)
    v1_only, g_none, _ = reg1(x=x, do_gradient=False)

    reg2 = Regularizer(alpha=2.5)
    v2, g2, _ = reg2(x=x, do_gradient=True)

    # non-multiple-of-128 size exercises the lane-tail path (no padding copies)
    x_odd = jax.random.normal(jax.random.PRNGKey(0), (5, 7, 9),
                              dtype=jnp.float32)
    v3, g3, _ = reg2(x=x_odd, do_gradient=True)

    jax.block_until_ready((v1, g1, v1_only, v2, g2, v3, g3))

    def _close(a, b):
        return bool(jnp.allclose(a, b, rtol=1e-5, atol=1e-5))

    def _ref_val(a, z):
        return 0.5 * a * jnp.sum(z.astype(jnp.float32) ** 2)

    assert _close(v1, _ref_val(1.0, x))
    assert _close(v1_only, _ref_val(1.0, x))
    assert _close(g1, x)
    assert g_none is None
    assert h1 == 1.0
    assert _close(v2, _ref_val(2.5, x))
    assert _close(g2, 2.5 * x)
    assert _close(v3, _ref_val(2.5, x_odd))
    assert _close(g3, 2.5 * x_odd)

    print("KERNEL_OK")
</pallas_src>

<mosaic_0001>
module attributes {stable_mosaic.version = 11 : i64} {
  func.func @_value_kernel(%arg0: i32, %arg1: memref<1x1xf32, #tpu.memory_space<smem>>, %arg2: memref<8x256xf32, #tpu.memory_space<vmem>>, %arg3: memref<1x1xf32, #tpu.memory_space<vmem>>) attributes {dimension_semantics = [#tpu.dimension_semantics<arbitrary>], iteration_bounds = array<i64: 1>, scalar_prefetch = 0 : i64, scratch_operands = 0 : i64, tpu.core_type = #tpu.core_type<tc>, window_params = [{transform_indices = @transform_0, window_bounds = array<i64: 1, 1>}, {transform_indices = @transform_1, window_bounds = array<i64: 8, 256>}, {pipeline_mode = #tpu.pipeline_mode<synchronous>, transform_indices = @transform_2, window_bounds = array<i64: 1, 1>}]} {
    %c0 = arith.constant 0 : index
    %c0_0 = arith.constant 0 : index
    %0 = vector.load %arg2[%c0, %c0_0] : memref<8x256xf32, #tpu.memory_space<vmem>>, vector<8x256xf32>
    %1 = arith.mulf %0, %0 : vector<8x256xf32>
    %2 = vector.shape_cast %1 : vector<8x256xf32> to vector<1x8x256xf32>
    %cst = arith.constant dense<0.000000e+00> : vector<1xf32>
    %3 = vector.multi_reduction <add>, %2, %cst [1, 2] : vector<1x8x256xf32> to vector<1xf32>
    %4 = vector.shape_cast %3 : vector<1xf32> to vector<1x1x1xf32>
    %5 = vector.extract %4[0, 0, 0] : f32 from vector<1x1x1xf32>
    %c0_1 = arith.constant 0 : index
    %c0_2 = arith.constant 0 : index
    %6 = memref.load %arg1[%c0_1, %c0_2] : memref<1x1xf32, #tpu.memory_space<smem>>
    %cst_3 = arith.constant 5.000000e-01 : f32
    %7 = arith.mulf %cst_3, %6 : f32
    %8 = arith.mulf %7, %5 : f32
    %c0_i32 = arith.constant 0 : i32
    %9 = arith.cmpi eq, %arg0, %c0_i32 : i32
    %10 = arith.extui %9 : i1 to i32
    %c0_i32_4 = arith.constant 0 : i32
    %11 = arith.cmpi ne, %10, %c0_i32_4 : i32
    scf.if %11 {
      %cst_9 = arith.constant 0.000000e+00 : f32
      %16 = vector.broadcast %cst_9 : f32 to vector<1x1xf32>
      %c0_10 = arith.constant 0 : index
      %c0_11 = arith.constant 0 : index
      %17 = vector.load %arg3[%c0_10, %c0_11] : memref<1x1xf32, #tpu.memory_space<vmem>>, vector<1x1xf32>
      tpu.vector_store %arg3[%c0_10, %c0_11], %16 {strides = array<i32>} : memref<1x1xf32, #tpu.memory_space<vmem>>, vector<1x1xf32>,
    } else {
    }
    %c0_5 = arith.constant 0 : index
    %c0_6 = arith.constant 0 : index
    %12 = vector.load %arg3[%c0_5, %c0_6] : memref<1x1xf32, #tpu.memory_space<vmem>>, vector<1x1xf32>
    %13 = vector.broadcast %8 : f32 to vector<1x1xf32>
    %14 = arith.addf %12, %13 : vector<1x1xf32>
    %c0_7 = arith.constant 0 : index
    %c0_8 = arith.constant 0 : index
    %15 = vector.load %arg3[%c0_7, %c0_8] : memref<1x1xf32, #tpu.memory_space<vmem>>, vector<1x1xf32>
    tpu.vector_store %arg3[%c0_7, %c0_8], %14 {strides = array<i32>} : memref<1x1xf32, #tpu.memory_space<vmem>>, vector<1x1xf32>,
    return
  }
  func.func @transform_0(%arg0: i32) -> (i32, i32) {
    %c0_i32 = arith.constant 0 : i32
    %c0_i32_0 = arith.constant 0 : i32
    %c0_i32_1 = arith.constant 0 : i32
    return %c0_i32, %c0_i32_0 : i32, i32
  }
  func.func @transform_1(%arg0: i32) -> (i32, i32) {
    %c0_i32 = arith.constant 0 : i32
    %c0_i32_0 = arith.constant 0 : i32
    return %arg0, %c0_i32 : i32, i32
  }
  func.func @transform_2(%arg0: i32) -> (i32, i32) {
    %c0_i32 = arith.constant 0 : i32
    %c0_i32_0 = arith.constant 0 : i32
    %c0_i32_1 = arith.constant 0 : i32
    return %c0_i32, %c0_i32_0 : i32, i32
  }
}

</mosaic_0001>

<llo_original>
// kernel: tpu_custom_call.1
$region0: #{tpu_custom_call.1}
  #allocation0 [shape = 'u32[]', space=smem, size = 0x4, offset = 0x4, fixed_abs, tag = 'smem constant byte address 0x4 - core index']
  #allocation1 [shape = 'u32[144,128]{1,0:T(1,128)}', space=vmem, size = 0x12000, scoped, tag = 'internal scratch']
  #allocation2 [shape = 'f32[1,1]{1,0:T(1,128)S(6)}', space=smem, size = 0x200, scoped, tag = 'scoped memory for tpu_custom_call.1']
  %s0 = inlined_call_operand.<no memory space> [shape: f32[1,1], index: 0, kind: input, shape index: {}]
  %s1 = inlined_call_operand.hbm [shape: f32[8,256], index: 1, kind: input, shape index: {}]
  %s2 = inlined_call_operand.hbm [shape: f32[1,1], index: 2, kind: output, shape index: {}]
  %s3 = sld [smem:[#allocation0]]
  $region26: #{tpu_custom_call.1} parent=0
    _
  %s5 = ssub.s32 1, %s3
  %s6 = scalar_select 0, %s5, %s3
  %7 = sst [smem:[#allocation2]] %s0
  $region1: #{tpu_custom_call.1} parent=0
    #allocation3 [shape = 'u8[8192]{0}', space=vmem, size = 0x2000, scoped, tag = 'input window, operand 1, single buffered']
    #allocation4 [shape = 's32[1]{0}', space=sflag, size = 0x4, scoped, tag = 'scoped memory for tpu_custom_call.1']
    #allocation5 [shape = 's32[1]{0}', space=sflag, size = 0x4, scoped, tag = 'scoped memory for tpu_custom_call.1']
    #allocation6 [shape = 'u8[512]{0}', space=vmem, size = 0x400, scoped, tag = 'output window, operand 0, single buffered']
    %8 = vsyncpa [#allocation4], 0
    %9 = vsyncpa [#allocation5], 0
    // Predicated region
    $region2: #{tpu_custom_call.1} parent=1 // pred_check
      _
    $region3: #{tpu_custom_call.1} parent=1 // pred_check_branch
      %11 = sbr.rel (0) target = $region5
    $region4: #{tpu_custom_call.1} parent=1 // pred_region
      _
    $region5: #{tpu_custom_call.1} parent=1 // pred_fallthru
      _
    // Predicated region
    $region6: #{tpu_custom_call.1} parent=1 // pred_check
      _
    $region7: #{tpu_custom_call.1} parent=1 // pred_check_branch
      %13 = sbr.rel (0) target = $region9
    $region8: #{tpu_custom_call.1} parent=1 // pred_region
      %s15 = ssub.s32 256, 256
      %16 = vsyncadd [#allocation4], %s15
      %s18 = sshll.u32 [#allocation3], 4
      %s19 = int_to_ptr.vmem [resolvable:$true] %s18
      %21 = dma.hbm_to_vmem [thread:$0]  %s1, 256, %s19, [#allocation4]
    $region9: #{tpu_custom_call.1} parent=1 // pred_fallthru
      _
    // Predicated region
    $region10: #{tpu_custom_call.1} parent=1 // pred_check
      _
    $region11: #{tpu_custom_call.1} parent=1 // pred_check_branch
      %23 = sbr.rel (0) target = $region13
    $region12: #{tpu_custom_call.1} parent=1 // pred_region
      %24 = dma.done [#allocation4], 256
    $region13: #{tpu_custom_call.1} parent=1 // pred_fallthru
      _
    %v25 = vld [vmem:[#allocation3] sm:$0xff]
    %v26 = vld [vmem:[#allocation3 + $0x8] sm:$0xff]
    %v27 = vmul.f32 %v25, %v25
    %v28 = vmul.f32 %v26, %v26
    %v29 = vadd.f32 %v27, %v28
    %30 = vadd.xlane.f32.xlu0 %v29
    %v31 = vpop.xlane.xlu0 %30
    %v32 = vrot.slane %v31, 4
    %v33 = vadd.f32 %v31, %v32
    %v34 = vrot.slane %v33, 2
    %v35 = vadd.f32 %v33, %v34
    %v36 = vrot.slane %v35, 1
    %v37 = vadd.f32 %v35, %v36
    %s38 = vtos %v37
    %s39 = sld [smem:[#allocation2]]
    %s40 = smul.f32 %s39, 0.5
    %s41 = smul.f32 %s40, %s38
    %p42 = scmp.eq.s32.totalorder 0, 0
    // Predicated region
    $region14: #{tpu_custom_call.1} parent=1 // pred_check
      %p43 = pneg %p42
    $region15: #{tpu_custom_call.1} parent=1 // pred_check_branch
      %45 = sbr.rel (%p43) target = $region17
    $region16: #{tpu_custom_call.1} parent=1 // pred_region
      %vm46 = vcmask 0
      %47 = vst.msk [vmem:[#allocation6] sm:$0x1] %vm46, 0.0
    $region17: #{tpu_custom_call.1} parent=1 // pred_fallthru
      _
    %v48 = vld [vmem:[#allocation6] sm:$0x1]
    %v49 = vstv %s41
    %v50 = vadd.f32 %v48, %v49
    %vm51 = vcmask 0
    %52 = vst.msk [vmem:[#allocation6] sm:$0x1] %vm51, %v50
    // Predicated region
    $region18: #{tpu_custom_call.1} parent=1 // pred_check
      _
    $region19: #{tpu_custom_call.1} parent=1 // pred_check_branch
      %54 = sbr.rel (0) target = $region21
    $region20: #{tpu_custom_call.1} parent=1 // pred_region
      %s56 = ssub.s32 16, 16
      %57 = vsyncadd [#allocation5], %s56
      %s59 = sshll.u32 [#allocation6], 4
      %s60 = int_to_ptr.vmem [resolvable:$true] %s59
      %62 = dma.vmem_to_hbm [thread:$0]  %s60, 16, %s2, [#allocation5]
    $region21: #{tpu_custom_call.1} parent=1 // pred_fallthru
      _
    // Predicated region
    $region22: #{tpu_custom_call.1} parent=1 // pred_check
      _
    $region23: #{tpu_custom_call.1} parent=1 // pred_check_branch
      %64 = sbr.rel (0) target = $region25
    $region24: #{tpu_custom_call.1} parent=1 // pred_region
      %65 = dma.done [#allocation5], 16
    $region25: #{tpu_custom_call.1} parent=1 // pred_fallthru
      _
    %66 = vsyncpa [#allocation4], 1
    %67 = vsyncpa [#allocation5], 1

</llo_original>
